<compile_context>
chip_gen: v7x
topology: tpu7x:2x2x1
jax: 0.10.0
libtpu: 0.0.40
codegen_flags: <defaults>
</compile_context>

<pallas_src>
import functools
import math

import jax
import jax.numpy as jnp
from jax.experimental import pallas as pl
from jax.experimental.pallas import tpu as pltpu


# ----------------------------------------------------------------------------
# Pallas kernel: packed complex attention with online softmax.
# Grid: (bh_blocks, q_blocks, k_blocks), k innermost ("arbitrary").
# ----------------------------------------------------------------------------
def _quantum_attention_kernel(qa_ref, qb_ref, kt_ref, vp_ref, o_ref,
                              m_sc, l_sc, acc_sc, *, use_bf16_eup):
    k_idx = pl.program_id(2)

    @pl.when(k_idx == 0)
    def _():
        m_sc[...] = jnp.full_like(m_sc, -jnp.inf)
        l_sc[...] = jnp.zeros_like(l_sc)
        acc_sc[...] = jnp.zeros_like(acc_sc)

    kt = kt_ref[...]                                   # (G, 2D, bk) bf16 = [Kr;Ki]
    # Packed complex scores; 1/sqrt(D) already folded into the resident Q slabs.
    #   sr = (Qr Kr^T - Qi Ki^T)/sqrt(D),  si = (Qi Kr^T + Qr Ki^T)/sqrt(D)
    sr = jnp.einsum('gqc,gck->gqk', qa_ref[...], kt,
                    preferred_element_type=jnp.float32)
    si = jnp.einsum('gqc,gck->gqk', qb_ref[...], kt,
                    preferred_element_type=jnp.float32)
    mag2 = sr * sr + si * si                           # f32 (from MXU f32 acc)

    m_prev = m_sc[...]
    if use_bf16_eup:
        # v6e/v7x: sqrt/exp chain in bf16 on the EUP (~2x transcendental
        # throughput). Softmax statistics and the accumulator stay f32.
        mag = jnp.sqrt(mag2.astype(jnp.bfloat16))
        m_new = jnp.maximum(
            m_prev, jnp.max(mag, axis=-1, keepdims=True).astype(jnp.float32))
        p_mm = jnp.exp(mag - m_new.astype(jnp.bfloat16))     # bf16 -> MXU directly
        p_sum = jnp.sum(p_mm.astype(jnp.float32), axis=-1, keepdims=True)
    else:
        # v5e and older: no bf16 VPU/EUP, keep the chain in f32.
        mag = jnp.sqrt(mag2)
        m_new = jnp.maximum(m_prev, jnp.max(mag, axis=-1, keepdims=True))
        p = jnp.exp(mag - m_new)
        p_sum = jnp.sum(p, axis=-1, keepdims=True)
        p_mm = p.astype(vp_ref.dtype)

    alpha = jnp.exp(m_prev - m_new)                    # == 0 on the first k step
    l_sc[...] = alpha * l_sc[...] + p_sum
    acc_sc[...] = alpha * acc_sc[...] + jnp.einsum(
        'gqk,gkc->gqc', p_mm, vp_ref[...], preferred_element_type=jnp.float32)
    m_sc[...] = m_new

    @pl.when(k_idx == pl.num_programs(2) - 1)
    def _():
        # Deferred normalization: one approx reciprocal per query row (EUP),
        # then a single full-width lane-dense store (no epilogue slicing).
        o_ref[...] = (acc_sc[...] *
                      pl.reciprocal(l_sc[...], approx=True)).astype(o_ref.dtype)


# ----------------------------------------------------------------------------
# Deterministic "parameter" construction (mirrors module __init__ formulas).
# ----------------------------------------------------------------------------
def make_combined_expert_pattern(head_dim, seq_len, max_sequence_length=2048):
    """Combined expert pattern E = sum_{8 experts, 3 aspects} P / (sqrt(3)*sqrt(8))."""
    t = jnp.linspace(0.0, 2.0 * jnp.pi, max_sequence_length).astype(jnp.float32)
    d = jnp.arange(head_dim, dtype=jnp.float32)
    phase = 2.0 * jnp.pi * d / head_dim                      # (D,)

    total = jnp.zeros((max_sequence_length, head_dim), dtype=jnp.complex64)
    num_experts = 8
    for i in range(num_experts):
        expert_sum = jnp.zeros_like(total)
        for base in (0.3, 0.2, 0.1):                         # syntax, semantics, context
            freq = base + 0.1 * i
            theta = freq * t[:, None] + phase[None, :]
            pat = jnp.exp(1j * theta.astype(jnp.complex64))  # (max_L, D)
            pat = pat / jnp.sqrt(jnp.sum(jnp.abs(pat) ** 2, axis=0, keepdims=True))
            expert_sum = expert_sum + pat
        total = total + expert_sum / math.sqrt(3.0)
    total = total / math.sqrt(num_experts)
    return total[:seq_len]                                   # (L, D) complex64


# TODO(synk): interference_scales are initialized by the PyTorch module but the
# pattern is never read inside _process_scale; their only effect is the x2
# factor (4 identical outputs / sqrt(4)), folded into the expert pattern below.
# TODO(synk): only the mask=None path of forward() is implemented.
# TODO(synk): for tiny head_dim (<=32) multiple heads could be packed into the
# lane dimension (2D < 128 wastes vreg rows / DMA beats); not implemented.


# ----------------------------------------------------------------------------
# Hardware / tiling helpers
# ----------------------------------------------------------------------------
def _physical_vmem_bytes():
    try:
        return int(pltpu.get_tpu_info().vmem_capacity_bytes)
    except Exception:
        return 64 * 2**20        # conservative (v7x per-TensorCore)


def _has_bf16_eup():
    """bf16 VPU/EUP exists on v6e/v7x; v5e and older only have the f32 path."""
    try:
        kind = jax.devices()[0].device_kind.lower()
    except Exception:
        return False
    return any(tag in kind for tag in ("v6", "v7", "tpu7"))


def _pick_block(n, target, multiple=8):
    """Largest block <= target dividing n (multiple of `multiple`, else n)."""
    if n <= target:
        return n
    b = (target // multiple) * multiple
    while b >= multiple:
        if n % b == 0:
            return b
        b -= multiple
    return n


def _pick_bh_block(bh, l, target_rows=512):
    """Batch several batch*head rows per grid step when L is small."""
    if l >= target_rows or bh <= 1:
        return 1
    g = min(bh, max(1, target_rows // l))
    if bh >= 2:
        g = min(g, bh // 2)   # keep >=2 steps on the parallel bh axis (v7x: 2 TCs)
    g = max(g, 1)
    while bh % g:
        g -= 1
    return g


def _vmem_budget_bytes(bh_block, block_q, block_k, d2, use_bf16_eup):
    """Rough in-kernel VMEM footprint estimate (temporaries + buffers)."""
    score = bh_block * block_q * block_k
    eup_bytes = 2 if use_bf16_eup else 4
    tmp = score * (3 * 4 + 3 * eup_bytes)              # sr, si, mag2 (f32) + mag, p, slack
    acc = bh_block * block_q * (d2 * 4 + 8)            # acc_sc + m/l scratch
    resident_q = 2 * 2 * bh_block * block_q * d2 * 2   # QA/QB, double-buffered bf16
    streamed = 2 * 2 * bh_block * block_k * d2 * 2     # KT/Vp, double-buffered bf16
    out = 2 * bh_block * block_q * d2 * 4              # f32 output, double-buffered
    return tmp + acc + resident_q + streamed + out


# ----------------------------------------------------------------------------
# Wrapper
# ----------------------------------------------------------------------------
def enhanced_quantum_attention(Q, K, V, expert_pattern,
                               *, block_q=None, block_k=None, bh_block=None):
    """Q, K, V: complex64 (B, H, L, D). expert_pattern: complex64 (L, D)."""
    B, H, L, D = Q.shape
    BH = B * H
    D2 = 2 * D
    inv_sqrt_d = 1.0 / math.sqrt(D)

    def split(x):
        return (jnp.real(x).astype(jnp.float32).reshape(BH, L, D),
                jnp.imag(x).astype(jnp.float32).reshape(BH, L, D))

    Qr, Qi = split(Q)
    Kr, Ki = split(K)
    Vr, Vi = split(V)

    mm = jnp.bfloat16   # MXU operand dtype; accumulation stays f32 in-kernel
    # Resident Q packings (1/sqrt(D) folded in; fuses with the mandatory
    # concat/bf16 cast): QA=[Qr|-Qi]/sqrt(D), QB=[Qi|Qr]/sqrt(D).
    QA = (inv_sqrt_d * jnp.concatenate([Qr, -Qi], axis=-1)).astype(mm)
    QB = (inv_sqrt_d * jnp.concatenate([Qi, Qr], axis=-1)).astype(mm)
    # Single streamed K slab, pre-transposed to (BH, 2D, L): in-kernel
    # contraction 'gqc,gck->gqk' needs no per-step transpose and the streamed
    # K tile is lane-dense along block_k.
    KT = jnp.concatenate([Kr, Ki], axis=-1).astype(mm).transpose(0, 2, 1)
    Vp = jnp.concatenate([Vr, Vi], axis=-1).astype(mm)                   # [Vr| Vi]

    use_bf16_eup = _has_bf16_eup()

    if block_q is None:
        block_q = _pick_block(L, 1024, multiple=8)
    if block_k is None:
        block_k = _pick_block(L, 1024, multiple=128)   # lane dim of score tiles
        if block_k == L and L > 1024:                  # no 128-multiple divisor
            block_k = _pick_block(L, 1024, multiple=8)
    if bh_block is None:
        bh_block = _pick_bh_block(BH, L)

    assert L % block_q == 0, (L, block_q)
    assert L % block_k == 0, (L, block_k)
    assert BH % bh_block == 0, (BH, bh_block)

    # Keep the combined parallel extent >= 2 for v7x's two TensorCores.
    if (BH // bh_block) * (L // block_q) < 2 and block_q > 8 and block_q % 16 == 0:
        block_q //= 2

    # Explicit VMEM budgeting (v7x: 64 MiB physical; v5e default scoped: 16 MiB).
    phys = _physical_vmem_bytes()
    usable = int(phys * 0.8)
    while _vmem_budget_bytes(bh_block, block_q, block_k, D2, use_bf16_eup) > usable:
        if block_k > 128 and block_k % 2 == 0:
            block_k //= 2          # halving a divisor of L keeps divisibility
        elif block_q > 128 and block_q % 2 == 0:
            block_q //= 2
        elif bh_block > 1 and bh_block % 2 == 0:
            bh_block //= 2
        else:
            break

    grid = (BH // bh_block, L // block_q, L // block_k)

    q_spec = pl.BlockSpec((bh_block, block_q, D2), lambda b, q, k: (b, q, 0))
    kt_spec = pl.BlockSpec((bh_block, D2, block_k), lambda b, q, k: (b, 0, k))
    v_spec = pl.BlockSpec((bh_block, block_k, D2), lambda b, q, k: (b, k, 0))
    o_spec = pl.BlockSpec((bh_block, block_q, D2), lambda b, q, k: (b, q, 0))

    kernel = functools.partial(_quantum_attention_kernel,
                               use_bf16_eup=use_bf16_eup)

    out_packed = pl.pallas_call(
        kernel,
        out_shape=jax.ShapeDtypeStruct((BH, L, D2), jnp.float32),
        grid_spec=pltpu.PrefetchScalarGridSpec(
            num_scalar_prefetch=0,
            grid=grid,
            in_specs=[q_spec, q_spec, kt_spec, v_spec],
            out_specs=o_spec,
            scratch_shapes=[
                pltpu.VMEM((bh_block, block_q, 1), jnp.float32),   # running max
                pltpu.VMEM((bh_block, block_q, 1), jnp.float32),   # running denom
                pltpu.VMEM((bh_block, block_q, D2), jnp.float32),  # output accum
            ],
        ),
        compiler_params=pltpu.CompilerParams(
            dimension_semantics=("parallel", "parallel", "arbitrary"),
            vmem_limit_bytes=int(phys * 0.85)),
    )(QA, QB, KT, Vp)

    # Expert-pattern epilogue moved out of the kernel: the complex elementwise
    # multiply (with the x2 interference-scale factor folded in) fuses with the
    # slice -> complex -> reshape output pass in XLA.
    Er = 2.0 * jnp.real(expert_pattern).astype(jnp.float32)       # (L, D)
    Ei = 2.0 * jnp.imag(expert_pattern).astype(jnp.float32)
    o_r = out_packed[..., :D]
    o_i = out_packed[..., D:]
    res_r = o_r * Er[None] - o_i * Ei[None]
    res_i = o_r * Ei[None] + o_i * Er[None]
    out = jax.lax.complex(res_r, res_i)
    return out.reshape(B, H, L, D).astype(jnp.complex64)


# ----------------------------------------------------------------------------
# Pure-JAX reference (sanity check).
# ----------------------------------------------------------------------------
def _reference(Q, K, V, expert_pattern):
    B, H, L, D = Q.shape
    scores = jnp.einsum('bhld,bhmd->bhlm', Q, K)      # non-conjugated complex matmul
    mag = jnp.abs(scores) / math.sqrt(D)
    attn = jax.nn.softmax(mag, axis=-1)
    out = jnp.einsum('bhlm,bhmd->bhld', attn.astype(jnp.complex64), V)
    return 2.0 * out * expert_pattern[None, None]


if __name__ == "__main__":
    B, num_heads, L, head_dim = 2, 4, 8, 8   # dim = 32
    key = jax.random.PRNGKey(0)
    kq, kk, kv = jax.random.split(key, 3)

    def cplx(k):
        kr, ki = jax.random.split(k)
        r = jax.random.normal(kr, (B, num_heads, L, head_dim), dtype=jnp.float32)
        i = jax.random.normal(ki, (B, num_heads, L, head_dim), dtype=jnp.float32)
        return (r + 1j * i).astype(jnp.complex64)

    Q = cplx(kq)
    K = cplx(kk)
    V = cplx(kv)

    expert_pattern = make_combined_expert_pattern(head_dim, L)

    out = enhanced_quantum_attention(Q, K, V, expert_pattern)
    out = jax.block_until_ready(out)

    ref = _reference(Q, K, V, expert_pattern)
    assert out.shape == (B, num_heads, L, head_dim)
    err = float(jnp.max(jnp.abs(out - ref)))
    scale = float(jnp.max(jnp.abs(ref)))
    # bf16 MXU operands + (on v6e/v7x) bf16 sqrt/exp + approx reciprocal vs the
    # f32 reference -> few-percent tolerance.
    assert err <= 4e-2 * scale + 1e-6, (err, scale)

    print("KERNEL_OK")
</pallas_src>

<mosaic_0001>
module attributes {stable_mosaic.version = 11 : i64} {
  func.func @_quantum_attention_kernel(%arg0: i32, %arg1: i32, %arg2: i32, %arg3: memref<4x8x16xbf16, #tpu.memory_space<vmem>>, %arg4: memref<4x8x16xbf16, #tpu.memory_space<vmem>>, %arg5: memref<4x16x8xbf16, #tpu.memory_space<vmem>>, %arg6: memref<4x8x16xbf16, #tpu.memory_space<vmem>>, %arg7: memref<4x8x16xf32, #tpu.memory_space<vmem>>, %arg8: memref<4x8x1xf32, #tpu.memory_space<vmem>>, %arg9: memref<4x8x1xf32, #tpu.memory_space<vmem>>, %arg10: memref<4x8x16xf32, #tpu.memory_space<vmem>>) attributes {dimension_semantics = [#tpu.dimension_semantics<parallel>, #tpu.dimension_semantics<parallel>, #tpu.dimension_semantics<arbitrary>], iteration_bounds = array<i64: 2, 1, 1>, scalar_prefetch = 0 : i64, scratch_operands = 3 : i64, tpu.core_type = #tpu.core_type<tc>, window_params = [{transform_indices = @transform_0, window_bounds = array<i64: 4, 8, 16>}, {transform_indices = @transform_1, window_bounds = array<i64: 4, 8, 16>}, {transform_indices = @transform_2, window_bounds = array<i64: 4, 16, 8>}, {transform_indices = @transform_3, window_bounds = array<i64: 4, 8, 16>}, {transform_indices = @transform_4, window_bounds = array<i64: 4, 8, 16>}]} {
    %c0_i32 = arith.constant 0 : i32
    %0 = arith.cmpi eq, %arg2, %c0_i32 : i32
    %1 = arith.extui %0 : i1 to i32
    %c0_i32_0 = arith.constant 0 : i32
    %2 = arith.cmpi ne, %1, %c0_i32_0 : i32
    scf.if %2 {
      %cst_36 = arith.constant 0xFF800000 : f32
      %39 = vector.broadcast %cst_36 : f32 to vector<4x8x1xf32>
      %c0_37 = arith.constant 0 : index
      %c0_38 = arith.constant 0 : index
      %c0_39 = arith.constant 0 : index
      %40 = vector.load %arg8[%c0_37, %c0_38, %c0_39] : memref<4x8x1xf32, #tpu.memory_space<vmem>>, vector<4x8x1xf32>
      tpu.vector_store %arg8[%c0_37, %c0_38, %c0_39], %39 {strides = array<i32>} : memref<4x8x1xf32, #tpu.memory_space<vmem>>, vector<4x8x1xf32>,
      %cst_40 = arith.constant 0.000000e+00 : f32
      %41 = vector.broadcast %cst_40 : f32 to vector<4x8x1xf32>
      %c0_41 = arith.constant 0 : index
      %c0_42 = arith.constant 0 : index
      %c0_43 = arith.constant 0 : index
      %42 = vector.load %arg9[%c0_41, %c0_42, %c0_43] : memref<4x8x1xf32, #tpu.memory_space<vmem>>, vector<4x8x1xf32>
      tpu.vector_store %arg9[%c0_41, %c0_42, %c0_43], %41 {strides = array<i32>} : memref<4x8x1xf32, #tpu.memory_space<vmem>>, vector<4x8x1xf32>,
      %cst_44 = arith.constant 0.000000e+00 : f32
      %43 = vector.broadcast %cst_44 : f32 to vector<4x8x16xf32>
      %c0_45 = arith.constant 0 : index
      %c0_46 = arith.constant 0 : index
      %c0_47 = arith.constant 0 : index
      %44 = vector.load %arg10[%c0_45, %c0_46, %c0_47] : memref<4x8x16xf32, #tpu.memory_space<vmem>>, vector<4x8x16xf32>
      tpu.vector_store %arg10[%c0_45, %c0_46, %c0_47], %43 {strides = array<i32>} : memref<4x8x16xf32, #tpu.memory_space<vmem>>, vector<4x8x16xf32>,
    } else {
    }
    %c0 = arith.constant 0 : index
    %c0_1 = arith.constant 0 : index
    %c0_2 = arith.constant 0 : index
    %3 = vector.load %arg5[%c0, %c0_1, %c0_2] : memref<4x16x8xbf16, #tpu.memory_space<vmem>>, vector<4x16x8xbf16>
    %c0_3 = arith.constant 0 : index
    %c0_4 = arith.constant 0 : index
    %c0_5 = arith.constant 0 : index
    %4 = vector.load %arg3[%c0_3, %c0_4, %c0_5] : memref<4x8x16xbf16, #tpu.memory_space<vmem>>, vector<4x8x16xbf16>
    "tpu.trace_start"() <{level = 10 : i32, message = "gqc,gck->gqk"}> : () -> ()
    %cst = arith.constant dense<0.000000e+00> : vector<4x8x8xf32>
    %5 = tpu.matmul %4, %3, %cst {dimension_numbers = #tpu.dot_dimension_numbers<[2], [1], [1], [2], [0, 0, 0, 1, 1, 2], [0], [0]>} : vector<4x8x16xbf16>, vector<4x16x8xbf16>, vector<4x8x8xf32> -> vector<4x8x8xf32>
    "tpu.trace_stop"() : () -> ()
    %c0_6 = arith.constant 0 : index
    %c0_7 = arith.constant 0 : index
    %c0_8 = arith.constant 0 : index
    %6 = vector.load %arg4[%c0_6, %c0_7, %c0_8] : memref<4x8x16xbf16, #tpu.memory_space<vmem>>, vector<4x8x16xbf16>
    "tpu.trace_start"() <{level = 10 : i32, message = "gqc,gck->gqk"}> : () -> ()
    %cst_9 = arith.constant dense<0.000000e+00> : vector<4x8x8xf32>
    %7 = tpu.matmul %6, %3, %cst_9 {dimension_numbers = #tpu.dot_dimension_numbers<[2], [1], [1], [2], [0, 0, 0, 1, 1, 2], [0], [0]>} : vector<4x8x16xbf16>, vector<4x16x8xbf16>, vector<4x8x8xf32> -> vector<4x8x8xf32>
    "tpu.trace_stop"() : () -> ()
    %8 = arith.mulf %5, %5 : vector<4x8x8xf32>
    %9 = arith.mulf %7, %7 : vector<4x8x8xf32>
    %10 = arith.addf %8, %9 : vector<4x8x8xf32>
    %c0_10 = arith.constant 0 : index
    %c0_11 = arith.constant 0 : index
    %c0_12 = arith.constant 0 : index
    %11 = vector.load %arg8[%c0_10, %c0_11, %c0_12] : memref<4x8x1xf32, #tpu.memory_space<vmem>>, vector<4x8x1xf32>
    %12 = math.sqrt %10 : vector<4x8x8xf32>
    %cst_13 = arith.constant dense<0xFF800000> : vector<4x8xf32>
    %13 = vector.multi_reduction <maximumf>, %12, %cst_13 [2] : vector<4x8x8xf32> to vector<4x8xf32>
    %14 = vector.shape_cast %13 : vector<4x8xf32> to vector<4x8x1xf32>
    %15 = arith.maximumf %11, %14 : vector<4x8x1xf32>
    %16 = vector.broadcast %15 : vector<4x8x1xf32> to vector<4x8x8xf32>
    %17 = arith.subf %12, %16 : vector<4x8x8xf32>
    %18 = math.exp %17 : vector<4x8x8xf32>
    %cst_14 = arith.constant dense<0.000000e+00> : vector<4x8xf32>
    %19 = vector.multi_reduction <add>, %18, %cst_14 [2] : vector<4x8x8xf32> to vector<4x8xf32>
    %20 = vector.shape_cast %19 : vector<4x8xf32> to vector<4x8x1xf32>
    %21 = arith.truncf %18 : vector<4x8x8xf32> to vector<4x8x8xbf16>
    %22 = arith.subf %11, %15 : vector<4x8x1xf32>
    %23 = math.exp %22 : vector<4x8x1xf32>
    %c0_15 = arith.constant 0 : index
    %c0_16 = arith.constant 0 : index
    %c0_17 = arith.constant 0 : index
    %24 = vector.load %arg9[%c0_15, %c0_16, %c0_17] : memref<4x8x1xf32, #tpu.memory_space<vmem>>, vector<4x8x1xf32>
    %25 = arith.mulf %23, %24 : vector<4x8x1xf32>
    %26 = arith.addf %25, %20 : vector<4x8x1xf32>
    %c0_18 = arith.constant 0 : index
    %c0_19 = arith.constant 0 : index
    %c0_20 = arith.constant 0 : index
    %27 = vector.load %arg9[%c0_18, %c0_19, %c0_20] : memref<4x8x1xf32, #tpu.memory_space<vmem>>, vector<4x8x1xf32>
    tpu.vector_store %arg9[%c0_18, %c0_19, %c0_20], %26 {strides = array<i32>} : memref<4x8x1xf32, #tpu.memory_space<vmem>>, vector<4x8x1xf32>,
    %c0_21 = arith.constant 0 : index
    %c0_22 = arith.constant 0 : index
    %c0_23 = arith.constant 0 : index
    %28 = vector.load %arg10[%c0_21, %c0_22, %c0_23] : memref<4x8x16xf32, #tpu.memory_space<vmem>>, vector<4x8x16xf32>
    %29 = vector.broadcast %23 : vector<4x8x1xf32> to vector<4x8x16xf32>
    %30 = arith.mulf %29, %28 : vector<4x8x16xf32>
    %c0_24 = arith.constant 0 : index
    %c0_25 = arith.constant 0 : index
    %c0_26 = arith.constant 0 : index
    %31 = vector.load %arg6[%c0_24, %c0_25, %c0_26] : memref<4x8x16xbf16, #tpu.memory_space<vmem>>, vector<4x8x16xbf16>
    "tpu.trace_start"() <{level = 10 : i32, message = "gqk,gkc->gqc"}> : () -> ()
    %cst_27 = arith.constant dense<0.000000e+00> : vector<4x8x16xf32>
    %32 = tpu.matmul %21, %31, %cst_27 {dimension_numbers = #tpu.dot_dimension_numbers<[2], [1], [1], [2], [0, 0, 0, 1, 1, 2], [0], [0]>} : vector<4x8x8xbf16>, vector<4x8x16xbf16>, vector<4x8x16xf32> -> vector<4x8x16xf32>
    "tpu.trace_stop"() : () -> ()
    %33 = arith.addf %30, %32 : vector<4x8x16xf32>
    %c0_28 = arith.constant 0 : index
    %c0_29 = arith.constant 0 : index
    %c0_30 = arith.constant 0 : index
    %34 = vector.load %arg10[%c0_28, %c0_29, %c0_30] : memref<4x8x16xf32, #tpu.memory_space<vmem>>, vector<4x8x16xf32>
    tpu.vector_store %arg10[%c0_28, %c0_29, %c0_30], %33 {strides = array<i32>} : memref<4x8x16xf32, #tpu.memory_space<vmem>>, vector<4x8x16xf32>,
    %c0_31 = arith.constant 0 : index
    %c0_32 = arith.constant 0 : index
    %c0_33 = arith.constant 0 : index
    %35 = vector.load %arg8[%c0_31, %c0_32, %c0_33] : memref<4x8x1xf32, #tpu.memory_space<vmem>>, vector<4x8x1xf32>
    tpu.vector_store %arg8[%c0_31, %c0_32, %c0_33], %15 {strides = array<i32>} : memref<4x8x1xf32, #tpu.memory_space<vmem>>, vector<4x8x1xf32>,
    %c0_i32_34 = arith.constant 0 : i32
    %36 = arith.cmpi eq, %arg2, %c0_i32_34 : i32
    %37 = arith.extui %36 : i1 to i32
    %c0_i32_35 = arith.constant 0 : i32
    %38 = arith.cmpi ne, %37, %c0_i32_35 : i32
    scf.if %38 {
      %c0_36 = arith.constant 0 : index
      %c0_37 = arith.constant 0 : index
      %c0_38 = arith.constant 0 : index
      %39 = vector.load %arg10[%c0_36, %c0_37, %c0_38] : memref<4x8x16xf32, #tpu.memory_space<vmem>>, vector<4x8x16xf32>
      %c0_39 = arith.constant 0 : index
      %c0_40 = arith.constant 0 : index
      %c0_41 = arith.constant 0 : index
      %40 = vector.load %arg9[%c0_39, %c0_40, %c0_41] : memref<4x8x1xf32, #tpu.memory_space<vmem>>, vector<4x8x1xf32>
      %41 = tpu.reciprocal %40 {approx = true} : vector<4x8x1xf32> -> vector<4x8x1xf32>
      %42 = vector.broadcast %41 : vector<4x8x1xf32> to vector<4x8x16xf32>
      %43 = arith.mulf %39, %42 : vector<4x8x16xf32>
      %c0_42 = arith.constant 0 : index
      %c0_43 = arith.constant 0 : index
      %c0_44 = arith.constant 0 : index
      %44 = vector.load %arg7[%c0_42, %c0_43, %c0_44] : memref<4x8x16xf32, #tpu.memory_space<vmem>>, vector<4x8x16xf32>
      tpu.vector_store %arg7[%c0_42, %c0_43, %c0_44], %43 {strides = array<i32>} : memref<4x8x16xf32, #tpu.memory_space<vmem>>, vector<4x8x16xf32>,
    } else {
    }
    return
  }
  func.func @transform_0(%arg0: i32, %arg1: i32, %arg2: i32) -> (i32, i32, i32) {
    %c0_i32 = arith.constant 0 : i32
    %c0_i32_0 = arith.constant 0 : i32
    return %arg0, %arg1, %c0_i32 : i32, i32, i32
  }
  func.func @transform_1(%arg0: i32, %arg1: i32, %arg2: i32) -> (i32, i32, i32) {
    %c0_i32 = arith.constant 0 : i32
    %c0_i32_0 = arith.constant 0 : i32
    return %arg0, %arg1, %c0_i32 : i32, i32, i32
  }
  func.func @transform_2(%arg0: i32, %arg1: i32, %arg2: i32) -> (i32, i32, i32) {
    %c0_i32 = arith.constant 0 : i32
    %c0_i32_0 = arith.constant 0 : i32
    return %arg0, %c0_i32, %arg2 : i32, i32, i32
  }
  func.func @transform_3(%arg0: i32, %arg1: i32, %arg2: i32) -> (i32, i32, i32) {
    %c0_i32 = arith.constant 0 : i32
    %c0_i32_0 = arith.constant 0 : i32
    return %arg0, %arg2, %c0_i32 : i32, i32, i32
  }
  func.func @transform_4(%arg0: i32, %arg1: i32, %arg2: i32) -> (i32, i32, i32) {
    %c0_i32 = arith.constant 0 : i32
    %c0_i32_0 = arith.constant 0 : i32
    return %arg0, %arg1, %c0_i32 : i32, i32, i32
  }
}

</mosaic_0001>

<llo_original>
// kernel: tpu_custom_call.1
$region0: #{tpu_custom_call.1}
  #allocation0 [shape = 'u32[]', space=smem, size = 0x4, offset = 0x4, fixed_abs, tag = 'smem constant byte address 0x4 - core index']
  #allocation1 [shape = 'u32[144,128]{1,0:T(1,128)}', space=vmem, size = 0x12000, scoped, tag = 'internal scratch']
  #allocation2 [shape = 'f32[4,8,1]{2,1,0:T(8,128)}', space=vmem, size = 0x4000, scoped, tag = 'scratch operand']
  #allocation3 [shape = 'f32[4,8,1]{2,1,0:T(8,128)}', space=vmem, size = 0x4000, scoped, tag = 'scratch operand']
  #allocation4 [shape = 'f32[4,8,16]{2,1,0:T(8,128)}', space=vmem, size = 0x4000, scoped, tag = 'scratch operand']
  %s0 = inlined_call_operand.vmem [shape: bf16[8,8,16], index: 0, kind: input, shape index: {}]
  %s1 = inlined_call_operand.vmem [shape: bf16[8,8,16], index: 1, kind: input, shape index: {}]
  %s2 = inlined_call_operand.vmem [shape: bf16[8,16,8], index: 2, kind: input, shape index: {}]
  %s3 = inlined_call_operand.vmem [shape: bf16[8,8,16], index: 3, kind: input, shape index: {}]
  %s4 = inlined_call_operand.hbm [shape: f32[8,8,16], index: 4, kind: output, shape index: {}]
  %s5 = sld [smem:[#allocation0]]
  $region57: #{tpu_custom_call.1} parent=0
    _
  %s7 = ssub.s32 1, %s5
  %s8 = scalar_select 0, %s7, %s5
  $region1: #{tpu_custom_call.1} parent=0
    #allocation5 [shape = 'u8[32768]{0}', space=vmem, size = 0x8000, scoped, tag = 'output window, operand 0']
    #allocation6 [shape = 's32[2]{0}', space=sflag, size = 0x8, scoped, tag = 'scoped memory for tpu_custom_call.1']
    %9 = vsyncpa [#allocation6], 0
    %s10 = scalar_lea.sflag [#allocation6], 1
    %11 = vsyncpa %s10, 0
    loop: start=0, step=1, limit=4
    $region2: #{tpu_custom_call.1} parent=1 // loop_pre_header
      _
    $region3: #{tpu_custom_call.1} parent=1 // loop_header
      %s13 = sphi 0, %s17
      %p14 = scmp.ge.s32.totalorder %s13, 4
      %s20 = sphi 0, %s39
      %s21 = sphi 0, %s35
      %s22 = sphi 0, %s31
      %s23 = sphi 0, %s20
      %s24 = sphi 0, %s21
      %s25 = sphi 0, %s22
      %s26 = sphi 0, %s23
      %s27 = sphi 0, %s24
      %s28 = sphi 0, %s25
      %s44 = sphi 0, %s46
      %s47 = sphi 0, %s44
      %s48 = sphi 0, %s47
      %s64 = sphi 0, %s48
      %s72 = sphi 0, %s74
      %s75 = sphi 0, %s72
      %s76 = sphi 0, %s75
      %s92 = sphi 0, %s76
      %s100 = sphi 0, %s102
      %s103 = sphi 0, %s100
      %s104 = sphi 0, %s103
      %s120 = sphi 0, %s104
      %s128 = sphi 0, %s130
      %s131 = sphi 0, %s128
      %s132 = sphi 0, %s131
      %s148 = sphi 0, %s132
      %s156 = sphi 0, %s158
      %s159 = sphi 0, %s156
      %s160 = sphi 0, %s159
      %s176 = sphi 0, %s160
    $region4: #{tpu_custom_call.1} parent=1 // loop_header_branch
      %16 = sbr.rel (%p14) target = $region8
    $region5: #{tpu_custom_call.1} parent=1 // loop_body
      %s18 = ssub.s32 %s13, 1
      %s19 = ssub.s32 %s13, 2
      %s29 = sadd.s32 1, %s22
      %p30 = scmp.ge.s32.totalorder %s29, 1
      %s31 = scalar_select %p30, 0, %s29
      %s32 = sadd.s32 1, %s21
      %s33 = scalar_select %p30, %s32, %s21
      %p34 = scmp.ge.s32.totalorder %s33, 1
      %s35 = scalar_select %p34, 0, %s33
      %s36 = sadd.s32 1, %s20
      %s37 = scalar_select %p34, %s36, %s20
      %p38 = scmp.ge.s32.totalorder %s37, 2
      %s39 = scalar_select %p38, 0, %s37
      %s40 = ssub.s32 %s20, %s39
      %s41 = ssub.s32 %s21, %s35
      %s42 = sor.u32 %s40, %s41
      %p43 = scmp.eq.s32.totalorder %s42, 0
      %s45 = sadd.s32 %s44, 1
      %s46 = scalar_select %p43, %s44, %s45
      %p49 = pneg %p43
      %p50 = scmp.eq.s32.totalorder %s13, 1
      %p51 = por %p49, %p50
      %p52 = scmp.ne.s32.totalorder %s44, %s47
      %p53 = scmp.eq.s32.totalorder %s13, 0
      %p54 = por %p52, %p53
      %p55 = scmp.ne.s32.totalorder %s44, %s47
      %p56 = scmp.eq.s32.totalorder %s18, 1
      %p57 = por %p55, %p56
      %p58 = scmp.ne.s32.totalorder %s47, %s48
      %p59 = scmp.eq.s32.totalorder %s18, 0
      %p60 = por %p58, %p59
      %p61 = scmp.ne.s32.totalorder %s47, %s48
      %p62 = scmp.eq.s32.totalorder %s19, 1
      %p63 = por %p61, %p62
      %p65 = scmp.ne.s32.totalorder %s48, %s64
      %p66 = scmp.eq.s32.totalorder %s19, 0
      %p67 = por %p65, %p66
      %s68 = ssub.s32 %s20, %s39
      %s69 = ssub.s32 %s21, %s35
      %s70 = sor.u32 %s68, %s69
      %p71 = scmp.eq.s32.totalorder %s70, 0
      %s73 = sadd.s32 %s72, 1
      %s74 = scalar_select %p71, %s72, %s73
      %p77 = pneg %p71
      %p78 = scmp.eq.s32.totalorder %s13, 1
      %p79 = por %p77, %p78
      %p80 = scmp.ne.s32.totalorder %s72, %s75
      %p81 = scmp.eq.s32.totalorder %s13, 0
      %p82 = por %p80, %p81
      %p83 = scmp.ne.s32.totalorder %s72, %s75
      %p84 = scmp.eq.s32.totalorder %s18, 1
      %p85 = por %p83, %p84
      %p86 = scmp.ne.s32.totalorder %s75, %s76
      %p87 = scmp.eq.s32.totalorder %s18, 0
      %p88 = por %p86, %p87
      %p89 = scmp.ne.s32.totalorder %s75, %s76
      %p90 = scmp.eq.s32.totalorder %s19, 1
      %p91 = por %p89, %p90
      %p93 = scmp.ne.s32.totalorder %s76, %s92
      %p94 = scmp.eq.s32.totalorder %s19, 0
      %p95 = por %p93, %p94
      %s96 = ssub.s32 %s20, %s39
      %s97 = ssub.s32 %s22, %s31
      %s98 = sor.u32 %s96, %s97
      %p99 = scmp.eq.s32.totalorder %s98, 0
      %s101 = sadd.s32 %s100, 1
      %s102 = scalar_select %p99, %s100, %s101
      %p105 = pneg %p99
      %p106 = scmp.eq.s32.totalorder %s13, 1
      %p107 = por %p105, %p106
      %p108 = scmp.ne.s32.totalorder %s100, %s103
      %p109 = scmp.eq.s32.totalorder %s13, 0
      %p110 = por %p108, %p109
      %p111 = scmp.ne.s32.totalorder %s100, %s103
      %p112 = scmp.eq.s32.totalorder %s18, 1
      %p113 = por %p111, %p112
      %p114 = scmp.ne.s32.totalorder %s103, %s104
      %p115 = scmp.eq.s32.totalorder %s18, 0
      %p116 = por %p114, %p115
      %p117 = scmp.ne.s32.totalorder %s103, %s104
      %p118 = scmp.eq.s32.totalorder %s19, 1
      %p119 = por %p117, %p118
      %p121 = scmp.ne.s32.totalorder %s104, %s120
      %p122 = scmp.eq.s32.totalorder %s19, 0
      %p123 = por %p121, %p122
      %s124 = ssub.s32 %s20, %s39
      %s125 = ssub.s32 %s22, %s31
      %s126 = sor.u32 %s124, %s125
      %p127 = scmp.eq.s32.totalorder %s126, 0
      %s129 = sadd.s32 %s128, 1
      %s130 = scalar_select %p127, %s128, %s129
      %p133 = pneg %p127
      %p134 = scmp.eq.s32.totalorder %s13, 1
      %p135 = por %p133, %p134
      %p136 = scmp.ne.s32.totalorder %s128, %s131
      %p137 = scmp.eq.s32.totalorder %s13, 0
      %p138 = por %p136, %p137
      %p139 = scmp.ne.s32.totalorder %s128, %s131
      %p140 = scmp.eq.s32.totalorder %s18, 1
      %p141 = por %p139, %p140
      %p142 = scmp.ne.s32.totalorder %s131, %s132
      %p143 = scmp.eq.s32.totalorder %s18, 0
      %p144 = por %p142, %p143
      %p145 = scmp.ne.s32.totalorder %s131, %s132
      %p146 = scmp.eq.s32.totalorder %s19, 1
      %p147 = por %p145, %p146
      %p149 = scmp.ne.s32.totalorder %s132, %s148
      %p150 = scmp.eq.s32.totalorder %s19, 0
      %p151 = por %p149, %p150
      %s152 = ssub.s32 %s20, %s39
      %s153 = ssub.s32 %s21, %s35
      %s154 = sor.u32 %s152, %s153
      %p155 = scmp.eq.s32.totalorder %s154, 0
      %s157 = sadd.s32 %s156, 1
      %s158 = scalar_select %p155, %s156, %s157
      %p161 = pneg %p155
      %p162 = scmp.eq.s32.totalorder %s13, 1
      %p163 = por %p161, %p162
      %p164 = scmp.ne.s32.totalorder %s156, %s159
      %p165 = scmp.eq.s32.totalorder %s13, 0
      %p166 = por %p164, %p165
      %p167 = scmp.ne.s32.totalorder %s156, %s159
      %p168 = scmp.eq.s32.totalorder %s18, 1
      %p169 = por %p167, %p168
      %p170 = scmp.ne.s32.totalorder %s159, %s160
      %p171 = scmp.eq.s32.totalorder %s18, 0
      %p172 = por %p170, %p171
      %p173 = scmp.ne.s32.totalorder %s159, %s160
      %p174 = scmp.eq.s32.totalorder %s19, 1
      %p175 = por %p173, %p174
      %p177 = scmp.ne.s32.totalorder %s160, %s176
      %p178 = scmp.eq.s32.totalorder %s19, 0
      %p179 = por %p177, %p178
      %p180 = scmp.le.s32.totalorder 1, %s13
      %p181 = scmp.lt.s32.totalorder %s13, 3
      %p182 = pnand %p180, %p181
      %p183 = pneg %p182
      // Predicated region
      $region9: #{tpu_custom_call.1} parent=5 // pred_check
        _
      $region10: #{tpu_custom_call.1} parent=5 // pred_check_branch
        %185 = sbr.rel (%p182) target = $region12
      $region11: #{tpu_custom_call.1} parent=5 // pred_region
        %s186 = ssub.s32 %s13, 1
      $region12: #{tpu_custom_call.1} parent=5 // pred_fallthru
        _
      %p187 = scmp.lt.s32.totalorder %s13, 2
      // Predicated region
      $region13: #{tpu_custom_call.1} parent=5 // pred_check
        %p188 = pneg %p187
      $region14: #{tpu_custom_call.1} parent=5 // pred_check_branch
        %190 = sbr.rel (%p188) target = $region16
      $region15: #{tpu_custom_call.1} parent=5 // pred_region
        // Predicated region
        $region17: #{tpu_custom_call.1} parent=15 // pred_check
          %p191 = pneg %p54
        $region18: #{tpu_custom_call.1} parent=15 // pred_check_branch
          %193 = sbr.rel (%p191) target = $region20
        $region19: #{tpu_custom_call.1} parent=15 // pred_region
          %s194 = smul.u32 4, %s20
          %p195 = scmp.lt.s32.totalorder %s194, 7
          %s196 = scalar_select %p195, %s194, 7
          %p197 = scmp.lt.s32.totalorder %s21, 0
          %s198 = scalar_select %p197, %s21, 0
          %s199 = sadd.s32 %s198, %s196
          %s200 = smul.addr %s199, 4
          %s201 = scalar_lea.vmem %s0, %s200
          %s202 = smul.u32 4, %s20
        $region20: #{tpu_custom_call.1} parent=15 // pred_fallthru
          _
        // Predicated region
        $region21: #{tpu_custom_call.1} parent=15 // pred_check
          %p203 = pneg %p82
        $region22: #{tpu_custom_call.1} parent=15 // pred_check_branch
          %205 = sbr.rel (%p203) target = $region24
        $region23: #{tpu_custom_call.1} parent=15 // pred_region
          %s206 = smul.u32 4, %s20
          %p207 = scmp.lt.s32.totalorder %s206, 7
          %s208 = scalar_select %p207, %s206, 7
          %p209 = scmp.lt.s32.totalorder %s21, 0
          %s210 = scalar_select %p209, %s21, 0
          %s211 = sadd.s32 %s210, %s208
          %s212 = smul.addr %s211, 4
          %s213 = scalar_lea.vmem %s1, %s212
          %s214 = smul.u32 4, %s20
        $region24: #{tpu_custom_call.1} parent=15 // pred_fallthru
          _
        // Predicated region
        $region25: #{tpu_custom_call.1} parent=15 // pred_check
          %p215 = pneg %p110
        $region26: #{tpu_custom_call.1} parent=15 // pred_check_branch
          %217 = sbr.rel (%p215) target = $region28
        $region27: #{tpu_custom_call.1} parent=15 // pred_region
          %s218 = smul.u32 4, %s20
          %p219 = scmp.lt.s32.totalorder %s218, 7
          %s220 = scalar_select %p219, %s218, 7
          %p221 = scmp.lt.s32.totalorder %s22, 0
          %s222 = scalar_select %p221, %s22, 0
          %s223 = smul.addr %s220, 2
          %s224 = sadd.s32 %s222, %s223
          %s225 = smul.addr %s224, 4
          %s226 = scalar_lea.vmem %s2, %s225
          %s227 = smul.u32 4, %s20
        $region28: #{tpu_custom_call.1} parent=15 // pred_fallthru
          _
        // Predicated region
        $region29: #{tpu_custom_call.1} parent=15 // pred_check
          %p228 = pneg %p138
        $region30: #{tpu_custom_call.1} parent=15 // pred_check_branch
          %230 = sbr.rel (%p228) target = $region32
        $region31: #{tpu_custom_call.1} parent=15 // pred_region
          %s231 = smul.u32 4, %s20
          %p232 = scmp.lt.s32.totalorder %s231, 7
          %s233 = scalar_select %p232, %s231, 7
          %p234 = scmp.lt.s32.totalorder %s22, 0
          %s235 = scalar_select %p234, %s22, 0
          %s236 = sadd.s32 %s235, %s233
          %s237 = smul.addr %s236, 4
          %s238 = scalar_lea.vmem %s3, %s237
          %s239 = smul.u32 4, %s20
        $region32: #{tpu_custom_call.1} parent=15 // pred_fallthru
          _
      $region16: #{tpu_custom_call.1} parent=5 // pred_fallthru
        _
      %p240 = scmp.le.s32.totalorder 1, %s13
      %p241 = scmp.lt.s32.totalorder %s13, 3
      %p242 = pnand %p240, %p241
      %p243 = pneg %p242
      // Predicated region
      $region33: #{tpu_custom_call.1} parent=5 // pred_check
        _
      $region34: #{tpu_custom_call.1} parent=5 // pred_check_branch
        %245 = sbr.rel (%p242) target = $region36
      $region35: #{tpu_custom_call.1} parent=5 // pred_region
        %s246 = ssub.s32 %s13, 1
        %s247 = smul.u32 4, %s23
        %p248 = scmp.lt.s32.totalorder %s247, 7
        %s249 = scalar_select %p248, %s247, 7
        %p250 = scmp.lt.s32.totalorder %s24, 0
        %s251 = scalar_select %p250, %s24, 0
        %s252 = sadd.s32 %s251, %s249
        %s253 = smul.addr %s252, 4
        %s254 = scalar_lea.vmem %s0, %s253
        %p255 = pneg %p60
        %p256 = pneg %p57
        %s257 = smul.u32 4, %s23
        %p258 = scmp.lt.s32.totalorder %s257, 7
        %s259 = scalar_select %p258, %s257, 7
        %p260 = scmp.lt.s32.totalorder %s24, 0
        %s261 = scalar_select %p260, %s24, 0
        %s262 = sadd.s32 %s261, %s259
        %s263 = smul.addr %s262, 4
        %s264 = scalar_lea.vmem %s1, %s263
        %p265 = pneg %p88
        %p266 = pneg %p85
        %s267 = smul.u32 4, %s23
        %p268 = scmp.lt.s32.totalorder %s267, 7
        %s269 = scalar_select %p268, %s267, 7
        %p270 = scmp.lt.s32.totalorder %s25, 0
        %s271 = scalar_select %p270, %s25, 0
        %s272 = smul.addr %s269, 2
        %s273 = sadd.s32 %s271, %s272
        %s274 = smul.addr %s273, 4
        %s275 = scalar_lea.vmem %s2, %s274
        %p276 = pneg %p116
        %p277 = pneg %p113
        %s278 = smul.u32 4, %s23
        %p279 = scmp.lt.s32.totalorder %s278, 7
        %s280 = scalar_select %p279, %s278, 7
        %p281 = scmp.lt.s32.totalorder %s25, 0
        %s282 = scalar_select %p281, %s25, 0
        %s283 = sadd.s32 %s282, %s280
        %s284 = smul.addr %s283, 4
        %s285 = scalar_lea.vmem %s3, %s284
        %p286 = pneg %p144
        %p287 = pneg %p141
        %p288 = pneg %p172
        %p289 = pneg %p169
        %s290 = sand.u32 %s159, 1
        %s291 = scalar_lea.sflag [#allocation6], %s290
        %s292 = sand.u32 %s159, 1
        %s293 = smul.addr %s292, 32
        %s294 = scalar_lea.vmem [#allocation5], %s293
        %s295 = smul.u32 4, %s23
        %p296 = scmp.lt.s32.totalorder %s295, 7
        %s297 = scalar_select %p296, %s295, 7
        %p298 = scmp.lt.s32.totalorder %s24, 0
        %s299 = scalar_select %p298, %s24, 0
        %s300 = sadd.s32 %s299, %s297
        %s301 = smul.addr %s300, 4
        %s302 = scalar_lea.vmem %s0, %s301
        %s303 = smul.u32 4, %s23
        %s304 = smul.u32 4, %s23
        %p305 = scmp.lt.s32.totalorder %s304, 7
        %s306 = scalar_select %p305, %s304, 7
        %p307 = scmp.lt.s32.totalorder %s24, 0
        %s308 = scalar_select %p307, %s24, 0
        %s309 = sadd.s32 %s308, %s306
        %s310 = smul.addr %s309, 4
        %s311 = scalar_lea.vmem %s1, %s310
        %s312 = smul.u32 4, %s23
        %s313 = smul.u32 4, %s23
        %p314 = scmp.lt.s32.totalorder %s313, 7
        %s315 = scalar_select %p314, %s313, 7
        %p316 = scmp.lt.s32.totalorder %s25, 0
        %s317 = scalar_select %p316, %s25, 0
        %s318 = smul.addr %s315, 2
        %s319 = sadd.s32 %s317, %s318
        %s320 = smul.addr %s319, 4
        %s321 = scalar_lea.vmem %s2, %s320
        %s322 = smul.u32 4, %s23
        %s323 = smul.u32 4, %s23
        %p324 = scmp.lt.s32.totalorder %s323, 7
        %s325 = scalar_select %p324, %s323, 7
        %p326 = scmp.lt.s32.totalorder %s25, 0
        %s327 = scalar_select %p326, %s25, 0
        %s328 = sadd.s32 %s327, %s325
        %s329 = smul.addr %s328, 4
        %s330 = scalar_lea.vmem %s3, %s329
        %s331 = smul.u32 4, %s23
        %s332 = smul.u32 4, %s23
        %p334 = scmp.eq.s32.totalorder %s25, 0
        // Predicated region
        $region37: #{tpu_custom_call.1} parent=35 // pred_check
          %p335 = pneg %p334
        $region38: #{tpu_custom_call.1} parent=35 // pred_check_branch
          %337 = sbr.rel (%p335) target = $region40
        $region39: #{tpu_custom_call.1} parent=35 // pred_region
          %vm338 = vcmask 7168
          %339 = vst.msk [vmem:[#allocation2] sm:$0xff] %vm338, -inf
          %340 = vst.msk [vmem:[#allocation2 + $0x8] sm:$0xff] %vm338, -inf
          %341 = vst.msk [vmem:[#allocation2 + $0x10] sm:$0xff] %vm338, -inf
          %342 = vst.msk [vmem:[#allocation2 + $0x18] sm:$0xff] %vm338, -inf
          %343 = vst.msk [vmem:[#allocation3] sm:$0xff] %vm338, 0.0
          %344 = vst.msk [vmem:[#allocation3 + $0x8] sm:$0xff] %vm338, 0.0
          %345 = vst.msk [vmem:[#allocation3 + $0x10] sm:$0xff] %vm338, 0.0
          %346 = vst.msk [vmem:[#allocation3 + $0x18] sm:$0xff] %vm338, 0.0
          %vm347 = vcmask 130048
          %348 = vst.msk [vmem:[#allocation4] sm:$0xff] %vm347, 0.0
          %349 = vst.msk [vmem:[#allocation4 + $0x8] sm:$0xff] %vm347, 0.0
          %350 = vst.msk [vmem:[#allocation4 + $0x10] sm:$0xff] %vm347, 0.0
          %351 = vst.msk [vmem:[#allocation4 + $0x18] sm:$0xff] %vm347, 0.0
        $region40: #{tpu_custom_call.1} parent=35 // pred_fallthru
          _
        %v352 = vld [vmem:[%s321] sm:$0xf]
        %v353 = vld [vmem:[%s321 + $0x4] sm:$0xf]
        %v354 = vld [vmem:[%s321 + $0x8] sm:$0xf]
        %v355 = vld [vmem:[%s321 + $0xc] sm:$0xf]
        %v356 = vld [vmem:[%s321 + $0x10] sm:$0xf]
        %v357 = vld [vmem:[%s321 + $0x14] sm:$0xf]
        %v358 = vld [vmem:[%s321 + $0x18] sm:$0xf]
        %v359 = vld [vmem:[%s321 + $0x1c] sm:$0xf]
        %v360 = vld [vmem:[%s302] sm:$0xf]
        %v361 = vld [vmem:[%s302 + $0x4] sm:$0xf]
        %v362 = vld [vmem:[%s302 + $0x8] sm:$0xf]
        %v363 = vld [vmem:[%s302 + $0xc] sm:$0xf]
        %v366 = vunpack.c.l.b16 %v352
        %v367 = vunpack.c.l.b16 %v353
        %v368 = vpack.c.b16 %v367, %v366
        %vm370 = vcmask 130048
        %v372 = vsel %vm370, %v360, 0
        %374 = vmatprep.subr.bf16.mxu0 0
        %375 = vmatpush1.bf16.msra.mxu0 %v368
        %376 = vmatprep.subr.bf16.mxu0 0
        %377 = vmatpush1.bf16.msra.mxu0 0
        %378 = vmatprep.subr.bf16.mxu0 0
        %379 = vmatpush1.bf16.msra.mxu0 0
        %380 = vmatprep.subr.bf16.mxu0 0
        %381 = vmatpush1.bf16.msra.mxu0 0
        %382 = vmatprep.subr.bf16.mxu0 0
        %383 = vmatpush1.bf16.msra.mxu0 0
        %384 = vmatprep.subr.bf16.mxu0 0
        %385 = vmatpush1.bf16.msra.mxu0 0
        %386 = vmatprep.subr.bf16.mxu0 0
        %387 = vmatpush1.bf16.msra.mxu0 0
        %388 = vmatprep.subr.bf16.mxu0 0
        %389 = vmatpush1.bf16.msra.mxu0 0
        %390 = vmatprep.subr.bf16.mxu0 0
        %391 = vmatpush1.bf16.msra.mxu0 0
        %392 = vmatprep.subr.bf16.mxu0 0
        %393 = vmatpush1.bf16.msra.mxu0 0
        %394 = vmatprep.subr.bf16.mxu0 0
        %395 = vmatpush1.bf16.msra.mxu0 0
        %396 = vmatprep.subr.bf16.mxu0 0
        %397 = vmatpush1.bf16.msra.mxu0 0
        %398 = vmatprep.subr.bf16.mxu0 0
        %399 = vmatpush1.bf16.msra.mxu0 0
        %400 = vmatprep.subr.bf16.mxu0 0
        %401 = vmatpush1.bf16.msra.mxu0 0
        %402 = vmatprep.subr.bf16.mxu0 0
        %403 = vmatpush1.bf16.msra.mxu0 0
        %404 = vmatprep.subr.bf16.mxu0 0
        %405 = vmatpush1.bf16.msra.mxu0 0
        %406 = vmatprep.mubr.bf16.mxu0 0
        %407 = vmatmul.mubr.bf16.gmra.mrb[0].mxu0 %v372
        %v408 = vpop.f32.mrb[0].mxu0
        %v409 = vadd.f32 0.0, %v408
        %v410 = vpop.f32.mrb[0].mxu0
        %v411 = vpop.f32.mrb[0].mxu0
        %v412 = vpop.f32.mrb[0].mxu0
        %413 = vdwg.mxu0
        %v416 = vunpack.c.l.b16 %v354
        %v417 = vunpack.c.l.b16 %v355
        %v418 = vpack.c.b16 %v417, %v416
        %v421 = vsel %vm370, %v361, 0
        %423 = vmatprep.subr.bf16.mxu0 0
        %424 = vmatpush1.bf16.msra.mxu0 %v418
        %425 = vmatprep.subr.bf16.mxu0 0
        %426 = vmatpush1.bf16.msra.mxu0 0
        %427 = vmatprep.subr.bf16.mxu0 0
        %428 = vmatpush1.bf16.msra.mxu0 0
        %429 = vmatprep.subr.bf16.mxu0 0
        %430 = vmatpush1.bf16.msra.mxu0 0
        %431 = vmatprep.subr.bf16.mxu0 0
        %432 = vmatpush1.bf16.msra.mxu0 0
        %433 = vmatprep.subr.bf16.mxu0 0
        %434 = vmatpush1.bf16.msra.mxu0 0
        %435 = vmatprep.subr.bf16.mxu0 0
        %436 = vmatpush1.bf16.msra.mxu0 0
        %437 = vmatprep.subr.bf16.mxu0 0
        %438 = vmatpush1.bf16.msra.mxu0 0
        %439 = vmatprep.subr.bf16.mxu0 0
        %440 = vmatpush1.bf16.msra.mxu0 0
        %441 = vmatprep.subr.bf16.mxu0 0
        %442 = vmatpush1.bf16.msra.mxu0 0
        %443 = vmatprep.subr.bf16.mxu0 0
        %444 = vmatpush1.bf16.msra.mxu0 0
        %445 = vmatprep.subr.bf16.mxu0 0
        %446 = vmatpush1.bf16.msra.mxu0 0
        %447 = vmatprep.subr.bf16.mxu0 0
        %448 = vmatpush1.bf16.msra.mxu0 0
        %449 = vmatprep.subr.bf16.mxu0 0
        %450 = vmatpush1.bf16.msra.mxu0 0
        %451 = vmatprep.subr.bf16.mxu0 0
        %452 = vmatpush1.bf16.msra.mxu0 0
        %453 = vmatprep.subr.bf16.mxu0 0
        %454 = vmatpush1.bf16.msra.mxu0 0
        %455 = vmatprep.mubr.bf16.mxu0 0
        %456 = vmatmul.mubr.bf16.gmra.mrb[0].mxu0 %v421
        %v457 = vpop.f32.mrb[0].mxu0
        %v458 = vadd.f32 0.0, %v457
        %v459 = vpop.f32.mrb[0].mxu0
        %v460 = vpop.f32.mrb[0].mxu0
        %v461 = vpop.f32.mrb[0].mxu0
        %462 = vdwg.mxu0
        %v465 = vunpack.c.l.b16 %v356
        %v466 = vunpack.c.l.b16 %v357
        %v467 = vpack.c.b16 %v466, %v465
        %v470 = vsel %vm370, %v362, 0
        %472 = vmatprep.subr.bf16.mxu0 0
        %473 = vmatpush1.bf16.msra.mxu0 %v467
        %474 = vmatprep.subr.bf16.mxu0 0
        %475 = vmatpush1.bf16.msra.mxu0 0
        %476 = vmatprep.subr.bf16.mxu0 0
        %477 = vmatpush1.bf16.msra.mxu0 0
        %478 = vmatprep.subr.bf16.mxu0 0
        %479 = vmatpush1.bf16.msra.mxu0 0
        %480 = vmatprep.subr.bf16.mxu0 0
        %481 = vmatpush1.bf16.msra.mxu0 0
        %482 = vmatprep.subr.bf16.mxu0 0
        %483 = vmatpush1.bf16.msra.mxu0 0
        %484 = vmatprep.subr.bf16.mxu0 0
        %485 = vmatpush1.bf16.msra.mxu0 0
        %486 = vmatprep.subr.bf16.mxu0 0
        %487 = vmatpush1.bf16.msra.mxu0 0
        %488 = vmatprep.subr.bf16.mxu0 0
        %489 = vmatpush1.bf16.msra.mxu0 0
        %490 = vmatprep.subr.bf16.mxu0 0
        %491 = vmatpush1.bf16.msra.mxu0 0
        %492 = vmatprep.subr.bf16.mxu0 0
        %493 = vmatpush1.bf16.msra.mxu0 0
        %494 = vmatprep.subr.bf16.mxu0 0
        %495 = vmatpush1.bf16.msra.mxu0 0
        %496 = vmatprep.subr.bf16.mxu0 0
        %497 = vmatpush1.bf16.msra.mxu0 0
        %498 = vmatprep.subr.bf16.mxu0 0
        %499 = vmatpush1.bf16.msra.mxu0 0
        %500 = vmatprep.subr.bf16.mxu0 0
        %501 = vmatpush1.bf16.msra.mxu0 0
        %502 = vmatprep.subr.bf16.mxu0 0
        %503 = vmatpush1.bf16.msra.mxu0 0
        %504 = vmatprep.mubr.bf16.mxu0 0
        %505 = vmatmul.mubr.bf16.gmra.mrb[0].mxu0 %v470
        %v506 = vpop.f32.mrb[0].mxu0
        %v507 = vadd.f32 0.0, %v506
        %v508 = vpop.f32.mrb[0].mxu0
        %v509 = vpop.f32.mrb[0].mxu0
        %v510 = vpop.f32.mrb[0].mxu0
        %511 = vdwg.mxu0
        %v514 = vunpack.c.l.b16 %v358
        %v515 = vunpack.c.l.b16 %v359
        %v516 = vpack.c.b16 %v515, %v514
        %v519 = vsel %vm370, %v363, 0
        %521 = vmatprep.subr.bf16.mxu0 0
        %522 = vmatpush1.bf16.msra.mxu0 %v516
        %523 = vmatprep.subr.bf16.mxu0 0
        %524 = vmatpush1.bf16.msra.mxu0 0
        %525 = vmatprep.subr.bf16.mxu0 0
        %526 = vmatpush1.bf16.msra.mxu0 0
        %527 = vmatprep.subr.bf16.mxu0 0
        %528 = vmatpush1.bf16.msra.mxu0 0
        %529 = vmatprep.subr.bf16.mxu0 0
        %530 = vmatpush1.bf16.msra.mxu0 0
        %531 = vmatprep.subr.bf16.mxu0 0
        %532 = vmatpush1.bf16.msra.mxu0 0
        %533 = vmatprep.subr.bf16.mxu0 0
        %534 = vmatpush1.bf16.msra.mxu0 0
        %535 = vmatprep.subr.bf16.mxu0 0
        %536 = vmatpush1.bf16.msra.mxu0 0
        %537 = vmatprep.subr.bf16.mxu0 0
        %538 = vmatpush1.bf16.msra.mxu0 0
        %539 = vmatprep.subr.bf16.mxu0 0
        %540 = vmatpush1.bf16.msra.mxu0 0
        %541 = vmatprep.subr.bf16.mxu0 0
        %542 = vmatpush1.bf16.msra.mxu0 0
        %543 = vmatprep.subr.bf16.mxu0 0
        %544 = vmatpush1.bf16.msra.mxu0 0
        %545 = vmatprep.subr.bf16.mxu0 0
        %546 = vmatpush1.bf16.msra.mxu0 0
        %547 = vmatprep.subr.bf16.mxu0 0
        %548 = vmatpush1.bf16.msra.mxu0 0
        %549 = vmatprep.subr.bf16.mxu0 0
        %550 = vmatpush1.bf16.msra.mxu0 0
        %551 = vmatprep.subr.bf16.mxu0 0
        %552 = vmatpush1.bf16.msra.mxu0 0
        %553 = vmatprep.mubr.bf16.mxu0 0
        %554 = vmatmul.mubr.bf16.gmra.mrb[0].mxu0 %v519
        %v555 = vpop.f32.mrb[0].mxu0
        %v556 = vadd.f32 0.0, %v555
        %v557 = vpop.f32.mrb[0].mxu0
        %v558 = vpop.f32.mrb[0].mxu0
        %v559 = vpop.f32.mrb[0].mxu0
        %560 = vdwg.mxu0
        %v561 = vld [vmem:[%s311] sm:$0xf]
        %v562 = vld [vmem:[%s311 + $0x4] sm:$0xf]
        %v563 = vld [vmem:[%s311 + $0x8] sm:$0xf]
        %v564 = vld [vmem:[%s311 + $0xc] sm:$0xf]
        %v566 = vsel %vm370, %v561, 0
        %568 = vmatprep.subr.bf16.mxu0 0
        %569 = vmatpush1.bf16.msra.mxu0 %v368
        %570 = vmatprep.subr.bf16.mxu0 0
        %571 = vmatpush1.bf16.msra.mxu0 0
        %572 = vmatprep.subr.bf16.mxu0 0
        %573 = vmatpush1.bf16.msra.mxu0 0
        %574 = vmatprep.subr.bf16.mxu0 0
        %575 = vmatpush1.bf16.msra.mxu0 0
        %576 = vmatprep.subr.bf16.mxu0 0
        %577 = vmatpush1.bf16.msra.mxu0 0
        %578 = vmatprep.subr.bf16.mxu0 0
        %579 = vmatpush1.bf16.msra.mxu0 0
        %580 = vmatprep.subr.bf16.mxu0 0
        %581 = vmatpush1.bf16.msra.mxu0 0
        %582 = vmatprep.subr.bf16.mxu0 0
        %583 = vmatpush1.bf16.msra.mxu0 0
        %584 = vmatprep.subr.bf16.mxu0 0
        %585 = vmatpush1.bf16.msra.mxu0 0
        %586 = vmatprep.subr.bf16.mxu0 0
        %587 = vmatpush1.bf16.msra.mxu0 0
        %588 = vmatprep.subr.bf16.mxu0 0
        %589 = vmatpush1.bf16.msra.mxu0 0
        %590 = vmatprep.subr.bf16.mxu0 0
        %591 = vmatpush1.bf16.msra.mxu0 0
        %592 = vmatprep.subr.bf16.mxu0 0
        %593 = vmatpush1.bf16.msra.mxu0 0
        %594 = vmatprep.subr.bf16.mxu0 0
        %595 = vmatpush1.bf16.msra.mxu0 0
        %596 = vmatprep.subr.bf16.mxu0 0
        %597 = vmatpush1.bf16.msra.mxu0 0
        %598 = vmatprep.subr.bf16.mxu0 0
        %599 = vmatpush1.bf16.msra.mxu0 0
        %600 = vmatprep.mubr.bf16.mxu0 0
        %601 = vmatmul.mubr.bf16.gmra.mrb[0].mxu0 %v566
        %v602 = vpop.f32.mrb[0].mxu0
        %v603 = vadd.f32 0.0, %v602
        %v604 = vpop.f32.mrb[0].mxu0
        %v605 = vpop.f32.mrb[0].mxu0
        %v606 = vpop.f32.mrb[0].mxu0
        %607 = vdwg.mxu0
        %v609 = vsel %vm370, %v562, 0
        %611 = vmatprep.subr.bf16.mxu0 0
        %612 = vmatpush1.bf16.msra.mxu0 %v418
        %613 = vmatprep.subr.bf16.mxu0 0
        %614 = vmatpush1.bf16.msra.mxu0 0
        %615 = vmatprep.subr.bf16.mxu0 0
        %616 = vmatpush1.bf16.msra.mxu0 0
        %617 = vmatprep.subr.bf16.mxu0 0
        %618 = vmatpush1.bf16.msra.mxu0 0
        %619 = vmatprep.subr.bf16.mxu0 0
        %620 = vmatpush1.bf16.msra.mxu0 0
        %621 = vmatprep.subr.bf16.mxu0 0
        %622 = vmatpush1.bf16.msra.mxu0 0
        %623 = vmatprep.subr.bf16.mxu0 0
        %624 = vmatpush1.bf16.msra.mxu0 0
        %625 = vmatprep.subr.bf16.mxu0 0
        %626 = vmatpush1.bf16.msra.mxu0 0
        %627 = vmatprep.subr.bf16.mxu0 0
        %628 = vmatpush1.bf16.msra.mxu0 0
        %629 = vmatprep.subr.bf16.mxu0 0
        %630 = vmatpush1.bf16.msra.mxu0 0
        %631 = vmatprep.subr.bf16.mxu0 0
        %632 = vmatpush1.bf16.msra.mxu0 0
        %633 = vmatprep.subr.bf16.mxu0 0
        %634 = vmatpush1.bf16.msra.mxu0 0
        %635 = vmatprep.subr.bf16.mxu0 0
        %636 = vmatpush1.bf16.msra.mxu0 0
        %637 = vmatprep.subr.bf16.mxu0 0
        %638 = vmatpush1.bf16.msra.mxu0 0
        %639 = vmatprep.subr.bf16.mxu0 0
        %640 = vmatpush1.bf16.msra.mxu0 0
        %641 = vmatprep.subr.bf16.mxu0 0
        %642 = vmatpush1.bf16.msra.mxu0 0
        %643 = vmatprep.mubr.bf16.mxu0 0
        %644 = vmatmul.mubr.bf16.gmra.mrb[0].mxu0 %v609
        %v645 = vpop.f32.mrb[0].mxu0
        %v646 = vadd.f32 0.0, %v645
        %v647 = vpop.f32.mrb[0].mxu0
        %v648 = vpop.f32.mrb[0].mxu0
        %v649 = vpop.f32.mrb[0].mxu0
        %650 = vdwg.mxu0
        %v652 = vsel %vm370, %v563, 0
        %654 = vmatprep.subr.bf16.mxu0 0
        %655 = vmatpush1.bf16.msra.mxu0 %v467
        %656 = vmatprep.subr.bf16.mxu0 0
        %657 = vmatpush1.bf16.msra.mxu0 0
        %658 = vmatprep.subr.bf16.mxu0 0
        %659 = vmatpush1.bf16.msra.mxu0 0
        %660 = vmatprep.subr.bf16.mxu0 0
        %661 = vmatpush1.bf16.msra.mxu0 0
        %662 = vmatprep.subr.bf16.mxu0 0
        %663 = vmatpush1.bf16.msra.mxu0 0
        %664 = vmatprep.subr.bf16.mxu0 0
        %665 = vmatpush1.bf16.msra.mxu0 0
        %666 = vmatprep.subr.bf16.mxu0 0
        %667 = vmatpush1.bf16.msra.mxu0 0
        %668 = vmatprep.subr.bf16.mxu0 0
        %669 = vmatpush1.bf16.msra.mxu0 0
        %670 = vmatprep.subr.bf16.mxu0 0
        %671 = vmatpush1.bf16.msra.mxu0 0
        %672 = vmatprep.subr.bf16.mxu0 0
        %673 = vmatpush1.bf16.msra.mxu0 0
        %674 = vmatprep.subr.bf16.mxu0 0
        %675 = vmatpush1.bf16.msra.mxu0 0
        %676 = vmatprep.subr.bf16.mxu0 0
        %677 = vmatpush1.bf16.msra.mxu0 0
        %678 = vmatprep.subr.bf16.mxu0 0
        %679 = vmatpush1.bf16.msra.mxu0 0
        %680 = vmatprep.subr.bf16.mxu0 0
        %681 = vmatpush1.bf16.msra.mxu0 0
        %682 = vmatprep.subr.bf16.mxu0 0
        %683 = vmatpush1.bf16.msra.mxu0 0
        %684 = vmatprep.subr.bf16.mxu0 0
        %685 = vmatpush1.bf16.msra.mxu0 0
        %686 = vmatprep.mubr.bf16.mxu0 0
        %687 = vmatmul.mubr.bf16.gmra.mrb[0].mxu0 %v652
        %v688 = vpop.f32.mrb[0].mxu0
        %v689 = vadd.f32 0.0, %v688
        %v690 = vpop.f32.mrb[0].mxu0
        %v691 = vpop.f32.mrb[0].mxu0
        %v692 = vpop.f32.mrb[0].mxu0
        %693 = vdwg.mxu0
        %v695 = vsel %vm370, %v564, 0
        %697 = vmatprep.subr.bf16.mxu0 0
        %698 = vmatpush1.bf16.msra.mxu0 %v516
        %699 = vmatprep.subr.bf16.mxu0 0
        %700 = vmatpush1.bf16.msra.mxu0 0
        %701 = vmatprep.subr.bf16.mxu0 0
        %702 = vmatpush1.bf16.msra.mxu0 0
        %703 = vmatprep.subr.bf16.mxu0 0
        %704 = vmatpush1.bf16.msra.mxu0 0
        %705 = vmatprep.subr.bf16.mxu0 0
        %706 = vmatpush1.bf16.msra.mxu0 0
        %707 = vmatprep.subr.bf16.mxu0 0
        %708 = vmatpush1.bf16.msra.mxu0 0
        %709 = vmatprep.subr.bf16.mxu0 0
        %710 = vmatpush1.bf16.msra.mxu0 0
        %711 = vmatprep.subr.bf16.mxu0 0
        %712 = vmatpush1.bf16.msra.mxu0 0
        %713 = vmatprep.subr.bf16.mxu0 0
        %714 = vmatpush1.bf16.msra.mxu0 0
        %715 = vmatprep.subr.bf16.mxu0 0
        %716 = vmatpush1.bf16.msra.mxu0 0
        %717 = vmatprep.subr.bf16.mxu0 0
        %718 = vmatpush1.bf16.msra.mxu0 0
        %719 = vmatprep.subr.bf16.mxu0 0
        %720 = vmatpush1.bf16.msra.mxu0 0
        %721 = vmatprep.subr.bf16.mxu0 0
        %722 = vmatpush1.bf16.msra.mxu0 0
        %723 = vmatprep.subr.bf16.mxu0 0
        %724 = vmatpush1.bf16.msra.mxu0 0
        %725 = vmatprep.subr.bf16.mxu0 0
        %726 = vmatpush1.bf16.msra.mxu0 0
        %727 = vmatprep.subr.bf16.mxu0 0
        %728 = vmatpush1.bf16.msra.mxu0 0
        %729 = vmatprep.mubr.bf16.mxu0 0
        %730 = vmatmul.mubr.bf16.gmra.mrb[0].mxu0 %v695
        %v731 = vpop.f32.mrb[0].mxu0
        %v732 = vadd.f32 0.0, %v731
        %v733 = vpop.f32.mrb[0].mxu0
        %v734 = vpop.f32.mrb[0].mxu0
        %v735 = vpop.f32.mrb[0].mxu0
        %736 = vdwg.mxu0
        %v737 = vmul.f32 %v409, %v409
        %v738 = vmul.f32 %v458, %v458
        %v739 = vmul.f32 %v507, %v507
        %v740 = vmul.f32 %v556, %v556
        %v741 = vmul.f32 %v603, %v603
        %v742 = vmul.f32 %v646, %v646
        %v743 = vmul.f32 %v689, %v689
        %v744 = vmul.f32 %v732, %v732
        %v745 = vadd.f32 %v737, %v741
        %v746 = vadd.f32 %v738, %v742
        %v747 = vadd.f32 %v739, %v743
        %v748 = vadd.f32 %v740, %v744
        %v749 = vld [vmem:[#allocation2] sm:$0xff]
        %v750 = vld [vmem:[#allocation2 + $0x8] sm:$0xff]
        %v751 = vld [vmem:[#allocation2 + $0x10] sm:$0xff]
        %v752 = vld [vmem:[#allocation2 + $0x18] sm:$0xff]
        %v753 = vrsqrt.pop %v745
        %v754 = vmul.f32 %v745, %v753
        %vm755 = vcmp.eq.f32.partialorder %v745, inf
        %v756 = vsel %vm755, %v745, %v754
        %vm757 = vcmp.eq.f32.partialorder %v745, 0.0
        %v758 = vand.u32 %v745, 2147483648
        %v759 = vsel %vm757, %v758, %v756
        %v760 = vrsqrt.pop %v746
        %v761 = vmul.f32 %v746, %v760
        %vm762 = vcmp.eq.f32.partialorder %v746, inf
        %v763 = vsel %vm762, %v746, %v761
        %vm764 = vcmp.eq.f32.partialorder %v746, 0.0
        %v765 = vand.u32 %v746, 2147483648
        %v766 = vsel %vm764, %v765, %v763
        %v767 = vrsqrt.pop %v747
        %v768 = vmul.f32 %v747, %v767
        %vm769 = vcmp.eq.f32.partialorder %v747, inf
        %v770 = vsel %vm769, %v747, %v768
        %vm771 = vcmp.eq.f32.partialorder %v747, 0.0
        %v772 = vand.u32 %v747, 2147483648
        %v773 = vsel %vm771, %v772, %v770
        %v774 = vrsqrt.pop %v748
        %v775 = vmul.f32 %v748, %v774
        %vm776 = vcmp.eq.f32.partialorder %v748, inf
        %v777 = vsel %vm776, %v748, %v775
        %vm778 = vcmp.eq.f32.partialorder %v748, 0.0
        %v779 = vand.u32 %v748, 2147483648
        %v780 = vsel %vm778, %v779, %v777
        %vm781 = vcmask 64512
        %v782 = vsel %vm781, %v759, -inf
        %783 = vmax.xlane.f32.xlu0 %v782
        %v784 = vpop.xlane.xlu0 %783
        %v785 = vsel %vm781, %v766, -inf
        %786 = vmax.xlane.f32.xlu0 %v785
        %v787 = vpop.xlane.xlu0 %786
        %v788 = vsel %vm781, %v773, -inf
        %789 = vmax.xlane.f32.xlu0 %v788
        %v790 = vpop.xlane.xlu0 %789
        %v791 = vsel %vm781, %v780, -inf
        %792 = vmax.xlane.f32.xlu0 %v791
        %v793 = vpop.xlane.xlu0 %792
        %v794 = vmax.f32 %v749, %v784
        %v795 = vmax.f32 %v750, %v787
        %v796 = vmax.f32 %v751, %v790
        %v797 = vmax.f32 %v752, %v793
        %799 = vset.pattern.permute.xlu0 0
        %800 = vperm.xlu0 %799, %v794
        %v801 = vpop.permute.xlu0 %800
        %804 = vset.pattern.permute.xlu0 0
        %805 = vperm.xlu0 %804, %v795
        %v806 = vpop.permute.xlu0 %805
        %809 = vset.pattern.permute.xlu0 0
        %810 = vperm.xlu0 %809, %v796
        %v811 = vpop.permute.xlu0 %810
        %814 = vset.pattern.permute.xlu0 0
        %815 = vperm.xlu0 %814, %v797
        %v816 = vpop.permute.xlu0 %815
        %v818 = vsub.f32 %v759, %v801
        %v819 = vsub.f32 %v766, %v806
        %v820 = vsub.f32 %v773, %v811
        %v821 = vsub.f32 %v780, %v816
        %v822 = vmul.f32 %v818, 1.442695
        %v823 = vpow.pop %v822
        %v824 = vmul.f32 %v819, 1.442695
        %v825 = vpow.pop %v824
        %v826 = vmul.f32 %v820, 1.442695
        %v827 = vpow.pop %v826
        %v828 = vmul.f32 %v821, 1.442695
        %v829 = vpow.pop %v828
        %v830 = vsel %vm781, %v823, 0.0
        %831 = vadd.xlane.f32.xlu0 %v830
        %v832 = vpop.xlane.xlu0 %831
        %v833 = vsel %vm781, %v825, 0.0
        %834 = vadd.xlane.f32.xlu0 %v833
        %v835 = vpop.xlane.xlu0 %834
        %v836 = vsel %vm781, %v827, 0.0
        %837 = vadd.xlane.f32.xlu0 %v836
        %v838 = vpop.xlane.xlu0 %837
        %v839 = vsel %vm781, %v829, 0.0
        %840 = vadd.xlane.f32.xlu0 %v839
        %v841 = vpop.xlane.xlu0 %840
        %v842 = vpack.c.bf16 %v823, %v823
        %v843 = vpack.c.bf16 %v825, %v825
        %v844 = vpack.c.bf16 %v827, %v827
        %v845 = vpack.c.bf16 %v829, %v829
        %v846 = vsub.f32 %v749, %v794
        %v847 = vsub.f32 %v750, %v795
        %v848 = vsub.f32 %v751, %v796
        %v849 = vsub.f32 %v752, %v797
        %v850 = vmul.f32 %v846, 1.442695
        %v851 = vpow.pop %v850
        %v852 = vmul.f32 %v847, 1.442695
        %v853 = vpow.pop %v852
        %v854 = vmul.f32 %v848, 1.442695
        %v855 = vpow.pop %v854
        %v856 = vmul.f32 %v849, 1.442695
        %v857 = vpow.pop %v856
        %v858 = vld [vmem:[#allocation3] sm:$0xff]
        %v859 = vld [vmem:[#allocation3 + $0x8] sm:$0xff]
        %v860 = vld [vmem:[#allocation3 + $0x10] sm:$0xff]
        %v861 = vld [vmem:[#allocation3 + $0x18] sm:$0xff]
        %v862 = vmul.f32 %v851, %v858
        %v863 = vmul.f32 %v853, %v859
        %v864 = vmul.f32 %v855, %v860
        %v865 = vmul.f32 %v857, %v861
        %v866 = vadd.f32 %v862, %v832
        %v867 = vadd.f32 %v863, %v835
        %v868 = vadd.f32 %v864, %v838
        %v869 = vadd.f32 %v865, %v841
        %vm870 = vcmask 7168
        %871 = vst.msk [vmem:[#allocation3] sm:$0xff] %vm870, %v866
        %872 = vst.msk [vmem:[#allocation3 + $0x8] sm:$0xff] %vm870, %v867
        %873 = vst.msk [vmem:[#allocation3 + $0x10] sm:$0xff] %vm870, %v868
        %874 = vst.msk [vmem:[#allocation3 + $0x18] sm:$0xff] %vm870, %v869
        %v875 = vld [vmem:[#allocation4] sm:$0xff]
        %v876 = vld [vmem:[#allocation4 + $0x8] sm:$0xff]
        %v877 = vld [vmem:[#allocation4 + $0x10] sm:$0xff]
        %v878 = vld [vmem:[#allocation4 + $0x18] sm:$0xff]
        %880 = vset.pattern.permute.xlu0 0
        %881 = vperm.xlu0 %880, %v851
        %v882 = vpop.permute.xlu0 %881
        %885 = vset.pattern.permute.xlu0 0
        %886 = vperm.xlu0 %885, %v853
        %v887 = vpop.permute.xlu0 %886
        %890 = vset.pattern.permute.xlu0 0
        %891 = vperm.xlu0 %890, %v855
        %v892 = vpop.permute.xlu0 %891
        %895 = vset.pattern.permute.xlu0 0
        %896 = vperm.xlu0 %895, %v857
        %v897 = vpop.permute.xlu0 %896
        %v899 = vmul.f32 %v882, %v875
        %v900 = vmul.f32 %v887, %v876
        %v901 = vmul.f32 %v892, %v877
        %v902 = vmul.f32 %v897, %v878
        %v903 = vld [vmem:[%s330] sm:$0xf]
        %v904 = vld [vmem:[%s330 + $0x4] sm:$0xf]
        %v905 = vld [vmem:[%s330 + $0x8] sm:$0xf]
        %v906 = vld [vmem:[%s330 + $0xc] sm:$0xf]
        %v908 = vsel %vm781, %v842, 0
        %vm910 = vcmask 1043456
        %v912 = vsel %vm910, %v903, 0
        %914 = vmatprep.subr.bf16.mxu0 0
        %915 = vmatpush1.bf16.msra.mxu0 %v912
        %916 = vmatprep.subr.bf16.mxu0 0
        %917 = vmatpush1.bf16.msra.mxu0 0
        %918 = vmatprep.subr.bf16.mxu0 0
        %919 = vmatpush1.bf16.msra.mxu0 0
        %920 = vmatprep.subr.bf16.mxu0 0
        %921 = vmatpush1.bf16.msra.mxu0 0
        %922 = vmatprep.subr.bf16.mxu0 0
        %923 = vmatpush1.bf16.msra.mxu0 0
        %924 = vmatprep.subr.bf16.mxu0 0
        %925 = vmatpush1.bf16.msra.mxu0 0
        %926 = vmatprep.subr.bf16.mxu0 0
        %927 = vmatpush1.bf16.msra.mxu0 0
        %928 = vmatprep.subr.bf16.mxu0 0
        %929 = vmatpush1.bf16.msra.mxu0 0
        %930 = vmatprep.subr.bf16.mxu0 0
        %931 = vmatpush1.bf16.msra.mxu0 0
        %932 = vmatprep.subr.bf16.mxu0 0
        %933 = vmatpush1.bf16.msra.mxu0 0
        %934 = vmatprep.subr.bf16.mxu0 0
        %935 = vmatpush1.bf16.msra.mxu0 0
        %936 = vmatprep.subr.bf16.mxu0 0
        %937 = vmatpush1.bf16.msra.mxu0 0
        %938 = vmatprep.subr.bf16.mxu0 0
        %939 = vmatpush1.bf16.msra.mxu0 0
        %940 = vmatprep.subr.bf16.mxu0 0
        %941 = vmatpush1.bf16.msra.mxu0 0
        %942 = vmatprep.subr.bf16.mxu0 0
        %943 = vmatpush1.bf16.msra.mxu0 0
        %944 = vmatprep.subr.bf16.mxu0 0
        %945 = vmatpush1.bf16.msra.mxu0 0
        %946 = vmatprep.mubr.bf16.mxu0 0
        %947 = vmatmul.mubr.bf16.gmra.mrb[0].mxu0 %v908
        %v948 = vpop.f32.mrb[0].mxu0
        %v949 = vadd.f32 0.0, %v948
        %v950 = vpop.f32.mrb[0].mxu0
        %v951 = vpop.f32.mrb[0].mxu0
        %v952 = vpop.f32.mrb[0].mxu0
        %953 = vdwg.mxu0
        %v955 = vsel %vm781, %v843, 0
        %v958 = vsel %vm910, %v904, 0
        %960 = vmatprep.subr.bf16.mxu0 0
        %961 = vmatpush1.bf16.msra.mxu0 %v958
        %962 = vmatprep.subr.bf16.mxu0 0
        %963 = vmatpush1.bf16.msra.mxu0 0
        %964 = vmatprep.subr.bf16.mxu0 0
        %965 = vmatpush1.bf16.msra.mxu0 0
        %966 = vmatprep.subr.bf16.mxu0 0
        %967 = vmatpush1.bf16.msra.mxu0 0
        %968 = vmatprep.subr.bf16.mxu0 0
        %969 = vmatpush1.bf16.msra.mxu0 0
        %970 = vmatprep.subr.bf16.mxu0 0
        %971 = vmatpush1.bf16.msra.mxu0 0
        %972 = vmatprep.subr.bf16.mxu0 0
        %973 = vmatpush1.bf16.msra.mxu0 0
        %974 = vmatprep.subr.bf16.mxu0 0
        %975 = vmatpush1.bf16.msra.mxu0 0
        %976 = vmatprep.subr.bf16.mxu0 0
        %977 = vmatpush1.bf16.msra.mxu0 0
        %978 = vmatprep.subr.bf16.mxu0 0
        %979 = vmatpush1.bf16.msra.mxu0 0
        %980 = vmatprep.subr.bf16.mxu0 0
        %981 = vmatpush1.bf16.msra.mxu0 0
        %982 = vmatprep.subr.bf16.mxu0 0
        %983 = vmatpush1.bf16.msra.mxu0 0
        %984 = vmatprep.subr.bf16.mxu0 0
        %985 = vmatpush1.bf16.msra.mxu0 0
        %986 = vmatprep.subr.bf16.mxu0 0
        %987 = vmatpush1.bf16.msra.mxu0 0
        %988 = vmatprep.subr.bf16.mxu0 0
        %989 = vmatpush1.bf16.msra.mxu0 0
        %990 = vmatprep.subr.bf16.mxu0 0
        %991 = vmatpush1.bf16.msra.mxu0 0
        %992 = vmatprep.mubr.bf16.mxu0 0
        %993 = vmatmul.mubr.bf16.gmra.mrb[0].mxu0 %v955
        %v994 = vpop.f32.mrb[0].mxu0
        %v995 = vadd.f32 0.0, %v994
        %v996 = vpop.f32.mrb[0].mxu0
        %v997 = vpop.f32.mrb[0].mxu0
        %v998 = vpop.f32.mrb[0].mxu0
        %999 = vdwg.mxu0
        %v1001 = vsel %vm781, %v844, 0
        %v1004 = vsel %vm910, %v905, 0
        %1006 = vmatprep.subr.bf16.mxu0 0
        %1007 = vmatpush1.bf16.msra.mxu0 %v1004
        %1008 = vmatprep.subr.bf16.mxu0 0
        %1009 = vmatpush1.bf16.msra.mxu0 0
        %1010 = vmatprep.subr.bf16.mxu0 0
        %1011 = vmatpush1.bf16.msra.mxu0 0
        %1012 = vmatprep.subr.bf16.mxu0 0
        %1013 = vmatpush1.bf16.msra.mxu0 0
        %1014 = vmatprep.subr.bf16.mxu0 0
        %1015 = vmatpush1.bf16.msra.mxu0 0
        %1016 = vmatprep.subr.bf16.mxu0 0
        %1017 = vmatpush1.bf16.msra.mxu0 0
        %1018 = vmatprep.subr.bf16.mxu0 0
        %1019 = vmatpush1.bf16.msra.mxu0 0
        %1020 = vmatprep.subr.bf16.mxu0 0
        %1021 = vmatpush1.bf16.msra.mxu0 0
        %1022 = vmatprep.subr.bf16.mxu0 0
        %1023 = vmatpush1.bf16.msra.mxu0 0
        %1024 = vmatprep.subr.bf16.mxu0 0
        %1025 = vmatpush1.bf16.msra.mxu0 0
        %1026 = vmatprep.subr.bf16.mxu0 0
        %1027 = vmatpush1.bf16.msra.mxu0 0
        %1028 = vmatprep.subr.bf16.mxu0 0
        %1029 = vmatpush1.bf16.msra.mxu0 0
        %1030 = vmatprep.subr.bf16.mxu0 0
        %1031 = vmatpush1.bf16.msra.mxu0 0
        %1032 = vmatprep.subr.bf16.mxu0 0
        %1033 = vmatpush1.bf16.msra.mxu0 0
        %1034 = vmatprep.subr.bf16.mxu0 0
        %1035 = vmatpush1.bf16.msra.mxu0 0
        %1036 = vmatprep.subr.bf16.mxu0 0
        %1037 = vmatpush1.bf16.msra.mxu0 0
        %1038 = vmatprep.mubr.bf16.mxu0 0
        %1039 = vmatmul.mubr.bf16.gmra.mrb[0].mxu0 %v1001
        %v1040 = vpop.f32.mrb[0].mxu0
        %v1041 = vadd.f32 0.0, %v1040
        %v1042 = vpop.f32.mrb[0].mxu0
        %v1043 = vpop.f32.mrb[0].mxu0
        %v1044 = vpop.f32.mrb[0].mxu0
        %1045 = vdwg.mxu0
        %v1047 = vsel %vm781, %v845, 0
        %v1050 = vsel %vm910, %v906, 0
        %1052 = vmatprep.subr.bf16.mxu0 0
        %1053 = vmatpush1.bf16.msra.mxu0 %v1050
        %1054 = vmatprep.subr.bf16.mxu0 0
        %1055 = vmatpush1.bf16.msra.mxu0 0
        %1056 = vmatprep.subr.bf16.mxu0 0
        %1057 = vmatpush1.bf16.msra.mxu0 0
        %1058 = vmatprep.subr.bf16.mxu0 0
        %1059 = vmatpush1.bf16.msra.mxu0 0
        %1060 = vmatprep.subr.bf16.mxu0 0
        %1061 = vmatpush1.bf16.msra.mxu0 0
        %1062 = vmatprep.subr.bf16.mxu0 0
        %1063 = vmatpush1.bf16.msra.mxu0 0
        %1064 = vmatprep.subr.bf16.mxu0 0
        %1065 = vmatpush1.bf16.msra.mxu0 0
        %1066 = vmatprep.subr.bf16.mxu0 0
        %1067 = vmatpush1.bf16.msra.mxu0 0
        %1068 = vmatprep.subr.bf16.mxu0 0
        %1069 = vmatpush1.bf16.msra.mxu0 0
        %1070 = vmatprep.subr.bf16.mxu0 0
        %1071 = vmatpush1.bf16.msra.mxu0 0
        %1072 = vmatprep.subr.bf16.mxu0 0
        %1073 = vmatpush1.bf16.msra.mxu0 0
        %1074 = vmatprep.subr.bf16.mxu0 0
        %1075 = vmatpush1.bf16.msra.mxu0 0
        %1076 = vmatprep.subr.bf16.mxu0 0
        %1077 = vmatpush1.bf16.msra.mxu0 0
        %1078 = vmatprep.subr.bf16.mxu0 0
        %1079 = vmatpush1.bf16.msra.mxu0 0
        %1080 = vmatprep.subr.bf16.mxu0 0
        %1081 = vmatpush1.bf16.msra.mxu0 0
        %1082 = vmatprep.subr.bf16.mxu0 0
        %1083 = vmatpush1.bf16.msra.mxu0 0
        %1084 = vmatprep.mubr.bf16.mxu0 0
        %1085 = vmatmul.mubr.bf16.gmra.mrb[0].mxu0 %v1047
        %v1086 = vpop.f32.mrb[0].mxu0
        %v1087 = vadd.f32 0.0, %v1086
        %v1088 = vpop.f32.mrb[0].mxu0
        %v1089 = vpop.f32.mrb[0].mxu0
        %v1090 = vpop.f32.mrb[0].mxu0
        %1091 = vdwg.mxu0
        %v1092 = vadd.f32 %v899, %v949
        %v1093 = vadd.f32 %v900, %v995
        %v1094 = vadd.f32 %v901, %v1041
        %v1095 = vadd.f32 %v902, %v1087
        %1096 = vst.msk [vmem:[#allocation4] sm:$0xff] %vm370, %v1092
        %1097 = vst.msk [vmem:[#allocation4 + $0x8] sm:$0xff] %vm370, %v1093
        %1098 = vst.msk [vmem:[#allocation4 + $0x10] sm:$0xff] %vm370, %v1094
        %1099 = vst.msk [vmem:[#allocation4 + $0x18] sm:$0xff] %vm370, %v1095
        %1100 = vst.msk [vmem:[#allocation2] sm:$0xff] %vm870, %v794
        %1101 = vst.msk [vmem:[#allocation2 + $0x8] sm:$0xff] %vm870, %v795
        %1102 = vst.msk [vmem:[#allocation2 + $0x10] sm:$0xff] %vm870, %v796
        %1103 = vst.msk [vmem:[#allocation2 + $0x18] sm:$0xff] %vm870, %v797
        // Predicated region
        $region41: #{tpu_custom_call.1} parent=35 // pred_check
          %p1104 = pneg %p334
        $region42: #{tpu_custom_call.1} parent=35 // pred_check_branch
          %1106 = sbr.rel (%p1104) target = $region44
        $region43: #{tpu_custom_call.1} parent=35 // pred_region
          %v1107 = vld [vmem:[#allocation4] sm:$0xff]
          %v1108 = vld [vmem:[#allocation4 + $0x8] sm:$0xff]
          %v1109 = vld [vmem:[#allocation4 + $0x10] sm:$0xff]
          %v1110 = vld [vmem:[#allocation4 + $0x18] sm:$0xff]
          %v1111 = vld [vmem:[#allocation3] sm:$0xff]
          %v1112 = vld [vmem:[#allocation3 + $0x8] sm:$0xff]
          %v1113 = vld [vmem:[#allocation3 + $0x10] sm:$0xff]
          %v1114 = vld [vmem:[#allocation3 + $0x18] sm:$0xff]
          %v1115 = vrcp.pop %v1111
          %v1116 = vrcp.pop %v1112
          %v1117 = vrcp.pop %v1113
          %v1118 = vrcp.pop %v1114
          %1120 = vset.pattern.permute.xlu0 0
          %1121 = vperm.xlu0 %1120, %v1115
          %v1122 = vpop.permute.xlu0 %1121
          %1125 = vset.pattern.permute.xlu0 0
          %1126 = vperm.xlu0 %1125, %v1116
          %v1127 = vpop.permute.xlu0 %1126
          %1130 = vset.pattern.permute.xlu0 0
          %1131 = vperm.xlu0 %1130, %v1117
          %v1132 = vpop.permute.xlu0 %1131
          %1135 = vset.pattern.permute.xlu0 0
          %1136 = vperm.xlu0 %1135, %v1118
          %v1137 = vpop.permute.xlu0 %1136
          %v1139 = vmul.f32 %v1107, %v1122
          %v1140 = vmul.f32 %v1108, %v1127
          %v1141 = vmul.f32 %v1109, %v1132
          %v1142 = vmul.f32 %v1110, %v1137
          %1143 = vst.msk [vmem:[%s294] sm:$0xff] %vm370, %v1139
          %1144 = vst.msk [vmem:[%s294 + $0x8] sm:$0xff] %vm370, %v1140
          %1145 = vst.msk [vmem:[%s294 + $0x10] sm:$0xff] %vm370, %v1141
          %1146 = vst.msk [vmem:[%s294 + $0x18] sm:$0xff] %vm370, %v1142
        $region44: #{tpu_custom_call.1} parent=35 // pred_fallthru
          _
        %s1147 = sand.u32 %s159, 1
        %s1148 = scalar_lea.sflag [#allocation6], %s1147
        %s1149 = sand.u32 %s159, 1
        %s1150 = smul.addr %s1149, 32
        %s1151 = scalar_lea.vmem [#allocation5], %s1150
        // Predicated region
        $region45: #{tpu_custom_call.1} parent=35 // pred_check
          %p1152 = pneg %p169
        $region46: #{tpu_custom_call.1} parent=35 // pred_check_branch
          %1154 = sbr.rel (%p1152) target = $region48
        $region47: #{tpu_custom_call.1} parent=35 // pred_region
          %s1155 = smul.u32 4, %s23
          %s1157 = ssub.s32 512, 512
          %1158 = vsyncadd %s1148, %s1157
          %s1159 = sadd.s32 %s24, %s1155
          %s1160 = smul.addr %s1159, 128
          %s1161 = scalar_lea.hbm %s4, %s1160
          %s1162 = sshll.u32 %s1151, 4
          %s1163 = int_to_ptr.vmem [resolvable:$true] %s1162
          %1168 = dma.vmem_to_hbm [thread:$0]  %s1163, 512, %s1161, %s1148, 128, 128, 8
        $region48: #{tpu_custom_call.1} parent=35 // pred_fallthru
          _
      $region36: #{tpu_custom_call.1} parent=5 // pred_fallthru
        _
      %p1169 = scmp.le.s32.totalorder 2, %s13
      // Predicated region
      $region49: #{tpu_custom_call.1} parent=5 // pred_check
        %p1170 = pneg %p1169
      $region50: #{tpu_custom_call.1} parent=5 // pred_check_branch
        %1172 = sbr.rel (%p1170) target = $region52
      $region51: #{tpu_custom_call.1} parent=5 // pred_region
        %s1173 = ssub.s32 %s13, 2
        // Predicated region
        $region53: #{tpu_custom_call.1} parent=51 // pred_check
          %p1174 = pneg %p175
        $region54: #{tpu_custom_call.1} parent=51 // pred_check_branch
          %1176 = sbr.rel (%p1174) target = $region56
        $region55: #{tpu_custom_call.1} parent=51 // pred_region
          %s1177 = sand.u32 %s160, 1
          %s1178 = scalar_lea.sflag [#allocation6], %s1177
          %s1179 = sand.u32 %s160, 1
          %s1180 = smul.addr %s1179, 32
          %s1181 = scalar_lea.vmem [#allocation5], %s1180
          %1182 = dma.done %s1178, 512
        $region56: #{tpu_custom_call.1} parent=51 // pred_fallthru
          _
      $region52: #{tpu_custom_call.1} parent=5 // pred_fallthru
        _
    $region6: #{tpu_custom_call.1} parent=1 // loop_footer
      %s17 = sadd.s32 1, %s13
    $region7: #{tpu_custom_call.1} parent=1 // loop_footer_branch
      %12 = sbr.rel target = $region3
    $region8: #{tpu_custom_call.1} parent=1 // loop_exit
      _
    %1183 = vsyncpa [#allocation6], 1
    %s1184 = scalar_lea.sflag [#allocation6], 1
    %1185 = vsyncpa %s1184, 1

</llo_original>
